<compile_context>
chip_gen: v7x
topology: tpu7x:2x2x1
jax: 0.10.0
libtpu: 0.0.40
codegen_flags: <defaults>
</compile_context>

<pallas_src>
import math
import jax
import jax.numpy as jnp
from jax.experimental import pallas as pl
from jax.experimental.pallas import tpu as pltpu


def _discriminator_kernel(x_ref, xt_ref, w1x_ref, w1xt_ref, b1_ref,
                          w2_ref, b2_ref, o_ref):
    x = x_ref[...]            # (TB, E)
    xt = xt_ref[...]          # (TB, E)

    # Layer 1: fused concat -> two small MXU matmuls against resident weights.
    h = jnp.dot(x, w1x_ref[...], preferred_element_type=jnp.float32)
    h = h + jnp.dot(xt, w1xt_ref[...], preferred_element_type=jnp.float32)
    h = h + b1_ref[...]       # (1, 4E) broadcast over the batch tile
    h = jnp.maximum(h, 0.0)   # ReLU
    # TODO(synk): Dropout(0.5) is identity in eval mode; training-mode random
    # masking (pltpu.prng_*) + 1/(1-p) rescaling is not implemented here.

    # Layer 2 (out_features = 1): VPU multiply + lane reduction instead of a
    # 1-wide MXU matmul.
    p = jnp.sum(h * w2_ref[...], axis=-1)        # (TB,)
    p = p + b2_ref[0, 0]                         # scalar bias from SMEM

    # Lane-dense store: batch on lanes.
    o_ref[...] = p.reshape(1, -1).astype(o_ref.dtype)


def discriminator_forward(x, x_tild, params, *, batch_tile=512):
    """x, x_tild: (B, E) float32. Returns (B,) float32 logits."""
    w1_x, w1_xt = params["w1_x"], params["w1_xt"]
    b1, w2_row, b2 = params["b1"], params["w2_row"], params["b2"]
    B, E = x.shape
    H = w1_x.shape[1]  # 4E

    if B <= batch_tile:
        TB, G = B, 1
    else:
        assert batch_tile % 128 == 0, "multi-tile batch requires lane-aligned tile"
        TB = batch_tile
        G = pl.cdiv(B, TB)

    Bp = G * TB
    if Bp != B:  # pad the batch up to a whole number of tiles
        pad = ((0, Bp - B), (0, 0))
        x = jnp.pad(x, pad)
        x_tild = jnp.pad(x_tild, pad)

    out = pl.pallas_call(
        _discriminator_kernel,
        out_shape=jax.ShapeDtypeStruct((1, Bp), jnp.float32),
        grid_spec=pltpu.PrefetchScalarGridSpec(
            num_scalar_prefetch=0,
            grid=(G,),
            in_specs=[
                pl.BlockSpec((TB, E), lambda i: (i, 0)),             # x tile
                pl.BlockSpec((TB, E), lambda i: (i, 0)),             # x_tild tile
                pl.BlockSpec((E, H), lambda i: (0, 0)),              # W1[:E]  (resident)
                pl.BlockSpec((E, H), lambda i: (0, 0)),              # W1[E:]  (resident)
                pl.BlockSpec((1, H), lambda i: (0, 0)),              # b1      (resident)
                pl.BlockSpec((1, H), lambda i: (0, 0)),              # w2 row  (resident)
                pl.BlockSpec((1, 1), lambda i: (0, 0),
                             memory_space=pltpu.MemorySpace.SMEM),   # b2 scalar
            ],
            out_specs=pl.BlockSpec((1, TB), lambda i: (0, i)),       # lane-dense logits
        ),
        compiler_params=pltpu.CompilerParams(
            dimension_semantics=("parallel",)),
    )(x, x_tild, w1_x, w1_xt, b1, w2_row, b2)

    return out.reshape(-1)[:B]   # p.view((-1,))


def init_discriminator_params(key, input_size):
    """Xavier-uniform weights (as in the PyTorch module) + PyTorch-default biases."""
    E = input_size
    in1, out1 = 2 * E, 4 * E
    in2, out2 = 4 * E, 1
    k1, k2, k3, k4 = jax.random.split(key, 4)

    def xavier_uniform(k, fan_in, fan_out):
        a = math.sqrt(6.0 / (fan_in + fan_out))
        # stored as (in, out) = transpose of PyTorch's (out, in) weight
        return jax.random.uniform(k, (fan_in, fan_out), jnp.float32, -a, a)

    def default_bias(k, fan_in, fan_out):
        bound = 1.0 / math.sqrt(fan_in)
        return jax.random.uniform(k, (1, fan_out), jnp.float32, -bound, bound)

    w1 = xavier_uniform(k1, in1, out1)                                # (2E, 4E)
    return {
        "w1_x": w1[:E, :],                                            # (E, 4E)
        "w1_xt": w1[E:, :],                                           # (E, 4E)
        "b1": default_bias(k3, in1, out1),                            # (1, 4E)
        # second Linear weight stored as a (1, 4E) row for the VPU/XLU path
        "w2_row": xavier_uniform(k2, in2, out2).reshape(1, in2),      # (1, 4E)
        "b2": default_bias(k4, in2, out2).reshape(1, 1),              # (1, 1)
    }


if __name__ == "__main__":
    input_size = 16     # encoding size E
    key = jax.random.PRNGKey(0)
    kx, kxt, kp = jax.random.split(key, 3)
    params = init_discriminator_params(kp, input_size)

    def reference(xa, xb):
        w1 = jnp.concatenate([params["w1_x"], params["w1_xt"]], axis=0)
        x_all = jnp.concatenate([xa, xb], axis=-1)
        h = jnp.maximum(x_all @ w1 + params["b1"], 0.0)
        return (h @ params["w2_row"][0] + params["b2"][0, 0]).reshape(-1)

    # Small shapes matching the module interface: two (B, E) encodings.
    batch = 8
    x = jax.random.normal(kx, (batch, input_size), jnp.float32)
    x_tild = jax.random.normal(kxt, (batch, input_size), jnp.float32)
    p = jax.block_until_ready(discriminator_forward(x, x_tild, params))
    assert p.shape == (batch,)
    assert jnp.allclose(p, reference(x, x_tild), atol=1e-4, rtol=1e-4)

    # Multi-tile path: exercises the parallel batch grid + resident weights
    # and a non-multiple batch (padding path).
    batch2 = 384
    kx2, kxt2 = jax.random.split(kx)
    x2 = jax.random.normal(kx2, (batch2, input_size), jnp.float32)
    xt2 = jax.random.normal(kxt2, (batch2, input_size), jnp.float32)
    p2 = jax.block_until_ready(
        discriminator_forward(x2, xt2, params, batch_tile=128))
    assert p2.shape == (batch2,)
    assert jnp.allclose(p2, reference(x2, xt2), atol=1e-4, rtol=1e-4)

    print("KERNEL_OK")
</pallas_src>

<mosaic_0001>
module attributes {stable_mosaic.version = 11 : i64} {
  func.func @_discriminator_kernel(%arg0: i32, %arg1: memref<8x16xf32, #tpu.memory_space<vmem>>, %arg2: memref<8x16xf32, #tpu.memory_space<vmem>>, %arg3: memref<16x64xf32, #tpu.memory_space<vmem>>, %arg4: memref<16x64xf32, #tpu.memory_space<vmem>>, %arg5: memref<1x64xf32, #tpu.memory_space<vmem>>, %arg6: memref<1x64xf32, #tpu.memory_space<vmem>>, %arg7: memref<1x1xf32, #tpu.memory_space<smem>>, %arg8: memref<1x8xf32, #tpu.memory_space<vmem>>) attributes {dimension_semantics = [#tpu.dimension_semantics<parallel>], iteration_bounds = array<i64: 1>, scalar_prefetch = 0 : i64, scratch_operands = 0 : i64, tpu.core_type = #tpu.core_type<tc>, window_params = [{transform_indices = @transform_0, window_bounds = array<i64: 8, 16>}, {transform_indices = @transform_1, window_bounds = array<i64: 8, 16>}, {pipeline_mode = #tpu.pipeline_mode<synchronous>, transform_indices = @transform_2, window_bounds = array<i64: 16, 64>}, {pipeline_mode = #tpu.pipeline_mode<synchronous>, transform_indices = @transform_3, window_bounds = array<i64: 16, 64>}, {pipeline_mode = #tpu.pipeline_mode<synchronous>, transform_indices = @transform_4, window_bounds = array<i64: 1, 64>}, {pipeline_mode = #tpu.pipeline_mode<synchronous>, transform_indices = @transform_5, window_bounds = array<i64: 1, 64>}, {transform_indices = @transform_6, window_bounds = array<i64: 1, 1>}, {transform_indices = @transform_7, window_bounds = array<i64: 1, 8>}]} {
    %c0 = arith.constant 0 : index
    %c0_0 = arith.constant 0 : index
    %0 = vector.load %arg1[%c0, %c0_0] : memref<8x16xf32, #tpu.memory_space<vmem>>, vector<8x16xf32>
    %c0_1 = arith.constant 0 : index
    %c0_2 = arith.constant 0 : index
    %1 = vector.load %arg2[%c0_1, %c0_2] : memref<8x16xf32, #tpu.memory_space<vmem>>, vector<8x16xf32>
    %c0_3 = arith.constant 0 : index
    %c0_4 = arith.constant 0 : index
    %2 = vector.load %arg3[%c0_3, %c0_4] : memref<16x64xf32, #tpu.memory_space<vmem>>, vector<16x64xf32>
    %cst = arith.constant dense<0.000000e+00> : vector<8x64xf32>
    %3 = tpu.matmul %0, %2, %cst {dimension_numbers = #tpu.dot_dimension_numbers<[1], [0], [0], [1], [0, 0, 1, 1], [], []>} : vector<8x16xf32>, vector<16x64xf32>, vector<8x64xf32> -> vector<8x64xf32>
    %c0_5 = arith.constant 0 : index
    %c0_6 = arith.constant 0 : index
    %4 = vector.load %arg4[%c0_5, %c0_6] : memref<16x64xf32, #tpu.memory_space<vmem>>, vector<16x64xf32>
    %cst_7 = arith.constant dense<0.000000e+00> : vector<8x64xf32>
    %5 = tpu.matmul %1, %4, %cst_7 {dimension_numbers = #tpu.dot_dimension_numbers<[1], [0], [0], [1], [0, 0, 1, 1], [], []>} : vector<8x16xf32>, vector<16x64xf32>, vector<8x64xf32> -> vector<8x64xf32>
    %6 = arith.addf %3, %5 : vector<8x64xf32>
    %c0_8 = arith.constant 0 : index
    %c0_9 = arith.constant 0 : index
    %7 = vector.load %arg5[%c0_8, %c0_9] : memref<1x64xf32, #tpu.memory_space<vmem>>, vector<1x64xf32>
    %8 = vector.broadcast %7 : vector<1x64xf32> to vector<8x64xf32>
    %9 = arith.addf %6, %8 : vector<8x64xf32>
    %cst_10 = arith.constant 0.000000e+00 : f32
    %10 = vector.broadcast %cst_10 : f32 to vector<8x64xf32>
    %11 = arith.maximumf %9, %10 : vector<8x64xf32>
    %c0_11 = arith.constant 0 : index
    %c0_12 = arith.constant 0 : index
    %12 = vector.load %arg6[%c0_11, %c0_12] : memref<1x64xf32, #tpu.memory_space<vmem>>, vector<1x64xf32>
    %13 = vector.broadcast %12 : vector<1x64xf32> to vector<8x64xf32>
    %14 = arith.mulf %11, %13 : vector<8x64xf32>
    %cst_13 = arith.constant dense<0.000000e+00> : vector<8xf32>
    %15 = vector.multi_reduction <add>, %14, %cst_13 [1] : vector<8x64xf32> to vector<8xf32>
    %c0_14 = arith.constant 0 : index
    %c0_15 = arith.constant 0 : index
    %16 = memref.load %arg7[%c0_14, %c0_15] : memref<1x1xf32, #tpu.memory_space<smem>>
    %17 = vector.broadcast %16 : f32 to vector<8xf32>
    %18 = arith.addf %15, %17 : vector<8xf32>
    %19 = vector.shape_cast %18 : vector<8xf32> to vector<1x8xf32>
    %c0_16 = arith.constant 0 : index
    %c0_17 = arith.constant 0 : index
    %20 = vector.load %arg8[%c0_16, %c0_17] : memref<1x8xf32, #tpu.memory_space<vmem>>, vector<1x8xf32>
    tpu.vector_store %arg8[%c0_16, %c0_17], %19 {strides = array<i32>} : memref<1x8xf32, #tpu.memory_space<vmem>>, vector<1x8xf32>,
    return
  }
  func.func @transform_0(%arg0: i32) -> (i32, i32) {
    %c0_i32 = arith.constant 0 : i32
    %c0_i32_0 = arith.constant 0 : i32
    return %arg0, %c0_i32 : i32, i32
  }
  func.func @transform_1(%arg0: i32) -> (i32, i32) {
    %c0_i32 = arith.constant 0 : i32
    %c0_i32_0 = arith.constant 0 : i32
    return %arg0, %c0_i32 : i32, i32
  }
  func.func @transform_2(%arg0: i32) -> (i32, i32) {
    %c0_i32 = arith.constant 0 : i32
    %c0_i32_0 = arith.constant 0 : i32
    %c0_i32_1 = arith.constant 0 : i32
    return %c0_i32, %c0_i32_0 : i32, i32
  }
  func.func @transform_3(%arg0: i32) -> (i32, i32) {
    %c0_i32 = arith.constant 0 : i32
    %c0_i32_0 = arith.constant 0 : i32
    %c0_i32_1 = arith.constant 0 : i32
    return %c0_i32, %c0_i32_0 : i32, i32
  }
  func.func @transform_4(%arg0: i32) -> (i32, i32) {
    %c0_i32 = arith.constant 0 : i32
    %c0_i32_0 = arith.constant 0 : i32
    %c0_i32_1 = arith.constant 0 : i32
    return %c0_i32, %c0_i32_0 : i32, i32
  }
  func.func @transform_5(%arg0: i32) -> (i32, i32) {
    %c0_i32 = arith.constant 0 : i32
    %c0_i32_0 = arith.constant 0 : i32
    %c0_i32_1 = arith.constant 0 : i32
    return %c0_i32, %c0_i32_0 : i32, i32
  }
  func.func @transform_6(%arg0: i32) -> (i32, i32) {
    %c0_i32 = arith.constant 0 : i32
    %c0_i32_0 = arith.constant 0 : i32
    %c0_i32_1 = arith.constant 0 : i32
    return %c0_i32, %c0_i32_0 : i32, i32
  }
  func.func @transform_7(%arg0: i32) -> (i32, i32) {
    %c0_i32 = arith.constant 0 : i32
    %c0_i32_0 = arith.constant 0 : i32
    return %c0_i32, %arg0 : i32, i32
  }
}

</mosaic_0001>

<llo_original>
// kernel: tpu_custom_call.1
$region0: #{tpu_custom_call.1}
  #allocation0 [shape = 'u32[]', space=smem, size = 0x4, offset = 0x4, fixed_abs, tag = 'smem constant byte address 0x4 - core index']
  #allocation1 [shape = 'u32[144,128]{1,0:T(1,128)}', space=vmem, size = 0x12000, scoped, tag = 'internal scratch']
  #allocation2 [shape = 'f32[1,1]{1,0:T(1,128)S(6)}', space=smem, size = 0x200, scoped, tag = 'scoped memory for tpu_custom_call.1']
  %s0 = inlined_call_operand.hbm [shape: f32[8,16], index: 0, kind: input, shape index: {}]
  %s1 = inlined_call_operand.hbm [shape: f32[8,16], index: 1, kind: input, shape index: {}]
  %s2 = inlined_call_operand.hbm [shape: f32[16,64], index: 2, kind: input, shape index: {}]
  %s3 = inlined_call_operand.hbm [shape: f32[16,64], index: 3, kind: input, shape index: {}]
  %s4 = inlined_call_operand.vmem [shape: f32[1,64], index: 4, kind: input, shape index: {}]
  %s5 = inlined_call_operand.vmem [shape: f32[1,64], index: 5, kind: input, shape index: {}]
  %s6 = inlined_call_operand.<no memory space> [shape: f32[1,1], index: 6, kind: input, shape index: {}]
  %s7 = inlined_call_operand.hbm [shape: f32[1,8], index: 7, kind: output, shape index: {}]
  %s8 = sld [smem:[#allocation0]]
  $region54: #{tpu_custom_call.1} parent=0
    _
  %s10 = ssub.s32 1, %s8
  %s11 = scalar_select 0, %s10, %s8
  %12 = sst [smem:[#allocation2]] %s6
  $region1: #{tpu_custom_call.1} parent=0
    #allocation3 [shape = 'u8[4096]{0}', space=vmem, size = 0x1000, scoped, tag = 'input window, operand 0, single buffered']
    #allocation4 [shape = 's32[1]{0}', space=sflag, size = 0x4, scoped, tag = 'scoped memory for tpu_custom_call.1']
    #allocation5 [shape = 's32[1]{0}', space=sflag, size = 0x4, scoped, tag = 'scoped memory for tpu_custom_call.1']
    #allocation6 [shape = 'u8[4096]{0}', space=vmem, size = 0x1000, scoped, tag = 'input window, operand 1, single buffered']
    #allocation7 [shape = 's32[1]{0}', space=sflag, size = 0x4, scoped, tag = 'scoped memory for tpu_custom_call.1']
    #allocation8 [shape = 'u8[8192]{0}', space=vmem, size = 0x2000, scoped, tag = 'input window, operand 2, single buffered']
    #allocation9 [shape = 'u8[8192]{0}', space=vmem, size = 0x2000, scoped, tag = 'input window, operand 3, single buffered']
    #allocation10 [shape = 's32[1]{0}', space=sflag, size = 0x4, scoped, tag = 'scoped memory for tpu_custom_call.1']
    #allocation11 [shape = 'u8[512]{0}', space=vmem, size = 0x400, scoped, tag = 'output window, operand 0, single buffered']
    %13 = vsyncpa [#allocation4], 0
    %14 = vsyncpa [#allocation7], 0
    %15 = vsyncpa [#allocation10], 0
    %16 = vsyncpa [#allocation5], 0
    // Predicated region
    $region2: #{tpu_custom_call.1} parent=1 // pred_check
      _
    $region3: #{tpu_custom_call.1} parent=1 // pred_check_branch
      %18 = sbr.rel (0) target = $region5
    $region4: #{tpu_custom_call.1} parent=1 // pred_region
      %s20 = ssub.s32 128, 128
      %21 = vsyncadd [#allocation4], %s20
      %s23 = sshll.u32 [#allocation3], 4
      %s24 = int_to_ptr.vmem [resolvable:$true] %s23
      %26 = dma.hbm_to_vmem [thread:$0]  %s0, 128, %s24, [#allocation4]
    $region5: #{tpu_custom_call.1} parent=1 // pred_fallthru
      _
    // Predicated region
    $region6: #{tpu_custom_call.1} parent=1 // pred_check
      _
    $region7: #{tpu_custom_call.1} parent=1 // pred_check_branch
      %28 = sbr.rel (0) target = $region9
    $region8: #{tpu_custom_call.1} parent=1 // pred_region
      %s30 = ssub.s32 128, 128
      %31 = vsyncadd [#allocation7], %s30
      %s33 = sshll.u32 [#allocation6], 4
      %s34 = int_to_ptr.vmem [resolvable:$true] %s33
      %36 = dma.hbm_to_vmem [thread:$0]  %s1, 128, %s34, [#allocation7]
    $region9: #{tpu_custom_call.1} parent=1 // pred_fallthru
      _
    // Predicated region
    $region10: #{tpu_custom_call.1} parent=1 // pred_check
      _
    $region11: #{tpu_custom_call.1} parent=1 // pred_check_branch
      %38 = sbr.rel (0) target = $region13
    $region12: #{tpu_custom_call.1} parent=1 // pred_region
      %s40 = ssub.s32 256, 256
      %41 = vsyncadd [#allocation7], %s40
      %s42 = sshll.u32 [#allocation8], 4
      %s43 = int_to_ptr.vmem [resolvable:$true] %s42
      %48 = dma.hbm_to_vmem [thread:$0]  %s2, 256, %s43, [#allocation7], 128, 128, 8
    $region13: #{tpu_custom_call.1} parent=1 // pred_fallthru
      _
    // Predicated region
    $region14: #{tpu_custom_call.1} parent=1 // pred_check
      _
    $region15: #{tpu_custom_call.1} parent=1 // pred_check_branch
      %50 = sbr.rel (0) target = $region17
    $region16: #{tpu_custom_call.1} parent=1 // pred_region
      %s52 = ssub.s32 256, 256
      %53 = vsyncadd [#allocation10], %s52
      %s54 = sshll.u32 [#allocation9], 4
      %s55 = int_to_ptr.vmem [resolvable:$true] %s54
      %60 = dma.hbm_to_vmem [thread:$0]  %s3, 256, %s55, [#allocation10], 128, 128, 8
    $region17: #{tpu_custom_call.1} parent=1 // pred_fallthru
      _
    // Predicated region
    $region18: #{tpu_custom_call.1} parent=1 // pred_check
      _
    $region19: #{tpu_custom_call.1} parent=1 // pred_check_branch
      %62 = sbr.rel (0) target = $region21
    $region20: #{tpu_custom_call.1} parent=1 // pred_region
      _
    $region21: #{tpu_custom_call.1} parent=1 // pred_fallthru
      _
    // Predicated region
    $region22: #{tpu_custom_call.1} parent=1 // pred_check
      _
    $region23: #{tpu_custom_call.1} parent=1 // pred_check_branch
      %64 = sbr.rel (0) target = $region25
    $region24: #{tpu_custom_call.1} parent=1 // pred_region
      _
    $region25: #{tpu_custom_call.1} parent=1 // pred_fallthru
      _
    // Predicated region
    $region26: #{tpu_custom_call.1} parent=1 // pred_check
      _
    $region27: #{tpu_custom_call.1} parent=1 // pred_check_branch
      %66 = sbr.rel (0) target = $region29
    $region28: #{tpu_custom_call.1} parent=1 // pred_region
      _
    $region29: #{tpu_custom_call.1} parent=1 // pred_fallthru
      _
    // Predicated region
    $region30: #{tpu_custom_call.1} parent=1 // pred_check
      _
    $region31: #{tpu_custom_call.1} parent=1 // pred_check_branch
      %68 = sbr.rel (0) target = $region33
    $region32: #{tpu_custom_call.1} parent=1 // pred_region
      %69 = dma.done [#allocation4], 128
    $region33: #{tpu_custom_call.1} parent=1 // pred_fallthru
      _
    // Predicated region
    $region34: #{tpu_custom_call.1} parent=1 // pred_check
      _
    $region35: #{tpu_custom_call.1} parent=1 // pred_check_branch
      %71 = sbr.rel (0) target = $region37
    $region36: #{tpu_custom_call.1} parent=1 // pred_region
      %72 = dma.done [#allocation7], 128
    $region37: #{tpu_custom_call.1} parent=1 // pred_fallthru
      _
    // Predicated region
    $region38: #{tpu_custom_call.1} parent=1 // pred_check
      _
    $region39: #{tpu_custom_call.1} parent=1 // pred_check_branch
      %74 = sbr.rel (0) target = $region41
    $region40: #{tpu_custom_call.1} parent=1 // pred_region
      %75 = dma.done [#allocation7], 256
    $region41: #{tpu_custom_call.1} parent=1 // pred_fallthru
      _
    // Predicated region
    $region42: #{tpu_custom_call.1} parent=1 // pred_check
      _
    $region43: #{tpu_custom_call.1} parent=1 // pred_check_branch
      %77 = sbr.rel (0) target = $region45
    $region44: #{tpu_custom_call.1} parent=1 // pred_region
      %78 = dma.done [#allocation10], 256
    $region45: #{tpu_custom_call.1} parent=1 // pred_fallthru
      _
    %v79 = vld [vmem:[#allocation3] sm:$0xff]
    %v80 = vld [vmem:[#allocation6] sm:$0xff]
    %v81 = vld [vmem:[#allocation8] sm:$0xff]
    %v82 = vld [vmem:[#allocation8 + $0x8] sm:$0xff]
    %v83 = vld [vmem:[#allocation9] sm:$0xff]
    %v84 = vld [vmem:[#allocation9 + $0x8] sm:$0xff]
    %vm85 = vcmask 130048
    %v87 = vsel %vm85, %v80, 0
    %89 = vmatprep.subr.mxu0 0.0
    %90 = vmatpush1.msra.mxu0 %v83
    %91 = vmatprep.subr.mxu0 0.0
    %92 = vmatpush1.msra.mxu0 %v84
    %93 = vmatprep.subr.mxu0 0.0
    %94 = vmatpush1.msra.mxu0 0.0
    %95 = vmatprep.subr.mxu0 0.0
    %96 = vmatpush1.msra.mxu0 0.0
    %97 = vmatprep.subr.mxu0 0.0
    %98 = vmatpush1.msra.mxu0 0.0
    %99 = vmatprep.subr.mxu0 0.0
    %100 = vmatpush1.msra.mxu0 0.0
    %101 = vmatprep.subr.mxu0 0.0
    %102 = vmatpush1.msra.mxu0 0.0
    %103 = vmatprep.subr.mxu0 0.0
    %104 = vmatpush1.msra.mxu0 0.0
    %105 = vmatprep.subr.mxu0 0.0
    %106 = vmatpush1.msra.mxu0 0.0
    %107 = vmatprep.subr.mxu0 0.0
    %108 = vmatpush1.msra.mxu0 0.0
    %109 = vmatprep.subr.mxu0 0.0
    %110 = vmatpush1.msra.mxu0 0.0
    %111 = vmatprep.subr.mxu0 0.0
    %112 = vmatpush1.msra.mxu0 0.0
    %113 = vmatprep.subr.mxu0 0.0
    %114 = vmatpush1.msra.mxu0 0.0
    %115 = vmatprep.subr.mxu0 0.0
    %116 = vmatpush1.msra.mxu0 0.0
    %117 = vmatprep.subr.mxu0 0.0
    %118 = vmatpush1.msra.mxu0 0.0
    %119 = vmatprep.subr.mxu0 0.0
    %120 = vmatpush1.msra.mxu0 0.0
    %121 = vmatprep.subr.mxu0 0.0
    %122 = vmatpush1.msra.mxu0 0.0
    %123 = vmatprep.subr.mxu0 0.0
    %124 = vmatpush1.msra.mxu0 0.0
    %125 = vmatprep.subr.mxu0 0.0
    %126 = vmatpush1.msra.mxu0 0.0
    %127 = vmatprep.subr.mxu0 0.0
    %128 = vmatpush1.msra.mxu0 0.0
    %129 = vmatprep.subr.mxu0 0.0
    %130 = vmatpush1.msra.mxu0 0.0
    %131 = vmatprep.subr.mxu0 0.0
    %132 = vmatpush1.msra.mxu0 0.0
    %133 = vmatprep.subr.mxu0 0.0
    %134 = vmatpush1.msra.mxu0 0.0
    %135 = vmatprep.subr.mxu0 0.0
    %136 = vmatpush1.msra.mxu0 0.0
    %137 = vmatprep.subr.mxu0 0.0
    %138 = vmatpush1.msra.mxu0 0.0
    %139 = vmatprep.subr.mxu0 0.0
    %140 = vmatpush1.msra.mxu0 0.0
    %141 = vmatprep.subr.mxu0 0.0
    %142 = vmatpush1.msra.mxu0 0.0
    %143 = vmatprep.subr.mxu0 0.0
    %144 = vmatpush1.msra.mxu0 0.0
    %145 = vmatprep.subr.mxu0 0.0
    %146 = vmatpush1.msra.mxu0 0.0
    %147 = vmatprep.subr.mxu0 0.0
    %148 = vmatpush1.msra.mxu0 0.0
    %149 = vmatprep.subr.mxu0 0.0
    %150 = vmatpush1.msra.mxu0 0.0
    %151 = vmatprep.subr.mxu0 0.0
    %152 = vmatpush1.msra.mxu0 0.0
    %153 = vmatprep.mubr.f32.mxu0 0.0
    %154 = vmatmul.mubr.f32.gmra.mrb[0].mxu0 %v87
    %v155 = vpop.f32.mrb[0].mxu0
    %v156 = vadd.f32 0.0, %v155
    %v157 = vpop.f32.mrb[0].mxu0
    %158 = vdwg.mxu0
    %v160 = vsel %vm85, %v79, 0
    %162 = vmatprep.subr.mxu0 0.0
    %163 = vmatpush1.msra.mxu0 %v81
    %164 = vmatprep.subr.mxu0 0.0
    %165 = vmatpush1.msra.mxu0 %v82
    %166 = vmatprep.subr.mxu0 0.0
    %167 = vmatpush1.msra.mxu0 0.0
    %168 = vmatprep.subr.mxu0 0.0
    %169 = vmatpush1.msra.mxu0 0.0
    %170 = vmatprep.subr.mxu0 0.0
    %171 = vmatpush1.msra.mxu0 0.0
    %172 = vmatprep.subr.mxu0 0.0
    %173 = vmatpush1.msra.mxu0 0.0
    %174 = vmatprep.subr.mxu0 0.0
    %175 = vmatpush1.msra.mxu0 0.0
    %176 = vmatprep.subr.mxu0 0.0
    %177 = vmatpush1.msra.mxu0 0.0
    %178 = vmatprep.subr.mxu0 0.0
    %179 = vmatpush1.msra.mxu0 0.0
    %180 = vmatprep.subr.mxu0 0.0
    %181 = vmatpush1.msra.mxu0 0.0
    %182 = vmatprep.subr.mxu0 0.0
    %183 = vmatpush1.msra.mxu0 0.0
    %184 = vmatprep.subr.mxu0 0.0
    %185 = vmatpush1.msra.mxu0 0.0
    %186 = vmatprep.subr.mxu0 0.0
    %187 = vmatpush1.msra.mxu0 0.0
    %188 = vmatprep.subr.mxu0 0.0
    %189 = vmatpush1.msra.mxu0 0.0
    %190 = vmatprep.subr.mxu0 0.0
    %191 = vmatpush1.msra.mxu0 0.0
    %192 = vmatprep.subr.mxu0 0.0
    %193 = vmatpush1.msra.mxu0 0.0
    %194 = vmatprep.subr.mxu0 0.0
    %195 = vmatpush1.msra.mxu0 0.0
    %196 = vmatprep.subr.mxu0 0.0
    %197 = vmatpush1.msra.mxu0 0.0
    %198 = vmatprep.subr.mxu0 0.0
    %199 = vmatpush1.msra.mxu0 0.0
    %200 = vmatprep.subr.mxu0 0.0
    %201 = vmatpush1.msra.mxu0 0.0
    %202 = vmatprep.subr.mxu0 0.0
    %203 = vmatpush1.msra.mxu0 0.0
    %204 = vmatprep.subr.mxu0 0.0
    %205 = vmatpush1.msra.mxu0 0.0
    %206 = vmatprep.subr.mxu0 0.0
    %207 = vmatpush1.msra.mxu0 0.0
    %208 = vmatprep.subr.mxu0 0.0
    %209 = vmatpush1.msra.mxu0 0.0
    %210 = vmatprep.subr.mxu0 0.0
    %211 = vmatpush1.msra.mxu0 0.0
    %212 = vmatprep.subr.mxu0 0.0
    %213 = vmatpush1.msra.mxu0 0.0
    %214 = vmatprep.subr.mxu0 0.0
    %215 = vmatpush1.msra.mxu0 0.0
    %216 = vmatprep.subr.mxu0 0.0
    %217 = vmatpush1.msra.mxu0 0.0
    %218 = vmatprep.subr.mxu0 0.0
    %219 = vmatpush1.msra.mxu0 0.0
    %220 = vmatprep.subr.mxu0 0.0
    %221 = vmatpush1.msra.mxu0 0.0
    %222 = vmatprep.subr.mxu0 0.0
    %223 = vmatpush1.msra.mxu0 0.0
    %224 = vmatprep.subr.mxu0 0.0
    %225 = vmatpush1.msra.mxu0 0.0
    %226 = vmatprep.mubr.f32.mxu0 0.0
    %227 = vmatmul.mubr.f32.gmra.mrb[0].mxu0 %v160
    %v228 = vpop.f32.mrb[0].mxu0
    %v229 = vadd.f32 %v156, %v228
    %v230 = vpop.f32.mrb[0].mxu0
    %231 = vdwg.mxu0
    %v232 = vld [vmem:[%s4] sm:$0x1]
    %v234 = vlaneseq
    %v235 = vshrl.u32 %v234, 7
    %v236 = vsub.s32 0, %v235
    %v237 = vrot.slane %v232, %v236
    %v239 = vadd.f32 %v229, %v237
    %v240 = vmax.f32 %v239, 0.0
    %v241 = vld [vmem:[%s5] sm:$0x1]
    %v243 = vlaneseq
    %v244 = vshrl.u32 %v243, 7
    %v245 = vsub.s32 0, %v244
    %v246 = vrot.slane %v241, %v245
    %v248 = vmul.f32 %v240, %v246
    %vm249 = vcmask 523264
    %v250 = vsel %vm249, %v248, 0.0
    %251 = vadd.xlane.f32.xlu0 %v250
    %v252 = vpop.xlane.xlu0 %251
    %s253 = sld [smem:[#allocation2]]
    %v254 = vstv %s253
    %v255 = vadd.f32 %v252, %v254
    %v257 = vlaneseq
    %v258 = vand.u32 %v257, 127
    %v259 = vlaneseq
    %v260 = vshrl.u32 %v259, 7
    %v261 = vsub.s32 %v258, %v260
    %v262 = vrot.slane %v255, %v261
    %vm264 = vcmask 57344
    %265 = vst.msk [vmem:[#allocation11] sm:$0x1] %vm264, %v262
    // Predicated region
    $region46: #{tpu_custom_call.1} parent=1 // pred_check
      _
    $region47: #{tpu_custom_call.1} parent=1 // pred_check_branch
      %267 = sbr.rel (0) target = $region49
    $region48: #{tpu_custom_call.1} parent=1 // pred_region
      %s269 = ssub.s32 16, 16
      %270 = vsyncadd [#allocation5], %s269
      %s272 = sshll.u32 [#allocation11], 4
      %s273 = int_to_ptr.vmem [resolvable:$true] %s272
      %275 = dma.vmem_to_hbm [thread:$0]  %s273, 16, %s7, [#allocation5]
    $region49: #{tpu_custom_call.1} parent=1 // pred_fallthru
      _
    // Predicated region
    $region50: #{tpu_custom_call.1} parent=1 // pred_check
      _
    $region51: #{tpu_custom_call.1} parent=1 // pred_check_branch
      %277 = sbr.rel (0) target = $region53
    $region52: #{tpu_custom_call.1} parent=1 // pred_region
      %278 = dma.done [#allocation5], 16
    $region53: #{tpu_custom_call.1} parent=1 // pred_fallthru
      _
    %279 = vsyncpa [#allocation4], 1
    %280 = vsyncpa [#allocation7], 1
    %281 = vsyncpa [#allocation10], 1
    %282 = vsyncpa [#allocation5], 1

</llo_original>
